<compile_context>
chip_gen: v5e
topology: v5e:2x2
jax: 0.10.0
libtpu: 0.0.40
codegen_flags: <defaults>
</compile_context>

<pallas_src>
import functools
import math

import numpy as np

import jax
import jax.numpy as jnp
from jax.experimental import pallas as pl
from jax.experimental.pallas import tpu as pltpu

_MIB = 1024 * 1024


def _level_params(h, w, num_levels):
    """Replicates SPPLayer.forward's (static) shape arithmetic per level."""
    params = []
    level = 1
    for i in range(num_levels):
        if i >= 1:
            level <<= 1
        k0 = math.ceil(h / level)
        k1 = math.ceil(w / level)
        ph = math.floor((k0 * level - h + 1) / 2)
        pw = math.floor((k1 * level - w + 1) / 2)
        h_new, w_new = h + 2 * ph, w + 2 * pw
        kh = math.ceil(h_new / level)
        kw = math.ceil(w_new / level)
        sh = math.floor(h_new / level)
        sw = math.floor(w_new / level)
        out_h = (h_new - kh) // sh + 1
        out_w = (w_new - kw) // sw + 1
        params.append(dict(kh=kh, kw=kw, sh=sh, sw=sw, ph=ph, pw=pw,
                           out_h=out_h, out_w=out_w))
    return params


def _build_pool_matrix(params, h, w, total_bins):
    """(total_bins, H*W) avg-pooling matrix; ZeroPad2d folded in as 0-weights.

    Each bin row holds 1/(kh*kw) at the window's valid positions (PyTorch's
    count_include_pad=True semantics: the zero-padded positions contribute 0
    to the sum but the divisor stays kh*kw).
    """
    pmat = np.zeros((total_bins, h * w), dtype=np.float32)
    b = 0
    for p in params:
        inv = 1.0 / float(p['kh'] * p['kw'])
        for oi in range(p['out_h']):
            r0 = oi * p['sh'] - p['ph']
            vr0, vr1 = max(r0, 0), min(r0 + p['kh'], h)
            for oj in range(p['out_w']):
                c0 = oj * p['sw'] - p['pw']
                vc0, vc1 = max(c0, 0), min(c0 + p['kw'], w)
                if vr1 > vr0 and vc1 > vc0:
                    for r in range(vr0, vr1):
                        pmat[b, r * w + vc0:r * w + vc1] = inv
                b += 1
    return jnp.asarray(pmat)


# --------------------------------------------------------------------------
# Kernels
# --------------------------------------------------------------------------

def _spp_avg_kernel(p_ref, x_ref, o_ref):
    """avg_pool pyramid = one MXU matmul per batch row + one dense store.

    p_ref : (total_bins, H*W)            VMEM  (constant pooling matrix)
    x_ref : (block_n, H*W, block_c)      VMEM  (C on the lane axis)
    o_ref : (block_n, total_bins, block_c) VMEM
    """
    bn = x_ref.shape[0]
    pm = p_ref[...]
    for b in range(bn):
        acc = jnp.dot(pm, x_ref[b],
                      preferred_element_type=jnp.float32,
                      precision=jax.lax.Precision.HIGHEST)
        o_ref[b] = acc.astype(o_ref.dtype)


def _spp_max_kernel(x_ref, o_ref, *, level_params, h, w, hierarchical):
    """max_pool pyramid over one (block_n, H, W, block_c) NHWC tile.

    Max is exact in the native dtype, so no f32 cast.  Reductions go H (major
    axis, VALU) first, then the small W/sublane remainder (XLU).  All bins are
    written back with one dense full-slab store.
    """
    bn = x_ref.shape[0]
    bc = x_ref.shape[-1]

    def win_max(r0, r1, c0, c1):
        win = x_ref[:, r0:r1, c0:c1, :]
        v = jnp.max(win, axis=1)      # reduce H (major/untiled axis) first
        return jnp.max(v, axis=1)     # then the small W/sublane remainder

    bins = []
    if hierarchical:
        # H, W divisible by the finest level: no padding, disjoint windows.
        # Compute the finest level once, derive coarser levels by 2x2 grouping.
        pf = level_params[-1]
        kh, kw, lvl = pf['kh'], pf['kw'], pf['out_h']
        fine = [[win_max(oi * kh, (oi + 1) * kh, oj * kw, (oj + 1) * kw)
                 for oj in range(lvl)] for oi in range(lvl)]
        grids = {lvl: fine}
        cur, size = fine, lvl
        while size > 1:
            size //= 2
            nxt = [[jnp.maximum(
                        jnp.maximum(cur[2 * oi][2 * oj], cur[2 * oi][2 * oj + 1]),
                        jnp.maximum(cur[2 * oi + 1][2 * oj], cur[2 * oi + 1][2 * oj + 1]))
                    for oj in range(size)] for oi in range(size)]
            grids[size] = nxt
            cur = nxt
        for p in level_params:                       # levels 1, 2, 4, ...
            g = grids[p['out_h']]
            for oi in range(p['out_h']):
                for oj in range(p['out_w']):
                    bins.append(g[oi][oj])
    else:
        for p in level_params:
            kh, kw, sh, sw = p['kh'], p['kw'], p['sh'], p['sw']
            ph, pw = p['ph'], p['pw']
            for oi in range(p['out_h']):
                r0 = oi * sh - ph
                vr0, vr1 = max(r0, 0), min(r0 + kh, h)
                for oj in range(p['out_w']):
                    c0 = oj * sw - pw
                    vc0, vc1 = max(c0, 0), min(c0 + kw, w)
                    if vr1 <= vr0 or vc1 <= vc0:     # window fully in the pad
                        bins.append(jnp.zeros((bn, bc), x_ref.dtype))
                        continue
                    v = win_max(vr0, vr1, vc0, vc1)
                    if (vr1 - vr0) * (vc1 - vc0) < kh * kw:
                        v = jnp.maximum(v, 0)        # ZeroPad2d zeros join max
                    bins.append(v)

    o_ref[...] = jnp.stack(bins, axis=1).astype(o_ref.dtype)


# --------------------------------------------------------------------------
# Wrapper
# --------------------------------------------------------------------------

def _vmem_capacity_bytes():
    """Generation-aware VMEM size; falls back to the v7x per-TC 64 MiB."""
    try:
        return int(pltpu.get_tpu_info().vmem_capacity_bytes)
    except Exception:
        return 64 * _MIB


def _pick_blocks(n, c_pad, h, w, total_bins, itemsize, vmem_cap):
    """Choose (block_n, block_c) so the double-buffered blocks are MiB-scale
    but stay inside a generation-aware VMEM budget (capped for v7x)."""
    budget = min(vmem_cap // 2, 48 * _MIB)
    per_nc = (h * w + total_bins) * itemsize          # in+out bytes per (n, c)

    def fits(bn, bc):
        return 2 * bn * bc * per_nc + 64 * 1024 <= budget

    # Largest channel tile (multiple of 128 dividing c_pad); prefer full C so
    # every input DMA is one contiguous slab.
    c_divs = [d for d in range(128, c_pad + 1, 128) if c_pad % d == 0]
    block_c = c_divs[0]
    for d in c_divs:
        if fits(1, d):
            block_c = d

    # Grow the batch tile to amortize per-grid-step overhead.
    block_n = 1
    for d in range(1, n + 1):
        if n % d == 0 and fits(d, block_c):
            block_n = d

    # Keep >= 2 grid steps so both v7x TensorCores get work; the extra step is
    # ~0.35 us on single-TC chips, i.e. negligible.
    if (n // block_n) * (c_pad // block_c) == 1:
        if n > 1:
            block_n = max(d for d in range(1, n) if n % d == 0)
        elif c_pad // 128 >= 2:
            block_c = max(d for d in c_divs if c_pad // d >= 2)
    return block_n, block_c


def spp_layer(x, num_levels, pool_type='avg_pool'):
    """JAX/Pallas equivalent of SPPLayer.forward.  x: (N, C, H, W)."""
    n, c, h, w = x.shape
    params = _level_params(h, w, num_levels)
    total_bins = sum(p['out_h'] * p['out_w'] for p in params)

    # NHWC with C padded up to a lane-dense multiple of 128.
    c_pad = max(128, ((c + 127) // 128) * 128)
    x_nhwc = jnp.transpose(x, (0, 2, 3, 1))                  # (N, H, W, C)
    if c_pad != c:
        x_nhwc = jnp.pad(x_nhwc, ((0, 0), (0, 0), (0, 0), (0, c_pad - c)))

    vmem_cap = _vmem_capacity_bytes()
    block_n, block_c = _pick_blocks(n, c_pad, h, w, total_bins,
                                    x.dtype.itemsize, vmem_cap)
    grid = (n // block_n, c_pad // block_c)
    cparams = pltpu.CompilerParams(
        dimension_semantics=("parallel", "parallel"),
        vmem_limit_bytes=int(vmem_cap * 3 // 4))
    out_shape = jax.ShapeDtypeStruct((n, total_bins, c_pad), x.dtype)
    out_spec = pl.BlockSpec((block_n, total_bins, block_c),
                            lambda ni, ci: (ni, 0, ci))

    if pool_type == 'avg_pool':
        pool_mat = _build_pool_matrix(params, h, w, total_bins)
        x_flat = x_nhwc.reshape(n, h * w, c_pad)             # free reshape
        out = pl.pallas_call(
            _spp_avg_kernel,
            out_shape=out_shape,
            grid_spec=pltpu.PrefetchScalarGridSpec(
                num_scalar_prefetch=0,
                grid=grid,
                in_specs=[
                    pl.BlockSpec((total_bins, h * w), lambda ni, ci: (0, 0)),
                    pl.BlockSpec((block_n, h * w, block_c),
                                 lambda ni, ci: (ni, 0, ci)),
                ],
                out_specs=out_spec,
            ),
            compiler_params=cparams,
        )(pool_mat, x_flat)
    else:  # 'max_pool'
        finest = 1 << (num_levels - 1)
        hierarchical = (h % finest == 0) and (w % finest == 0)
        kernel = functools.partial(_spp_max_kernel, level_params=params,
                                   h=h, w=w, hierarchical=hierarchical)
        out = pl.pallas_call(
            kernel,
            out_shape=out_shape,
            grid_spec=pltpu.PrefetchScalarGridSpec(
                num_scalar_prefetch=0,
                grid=grid,
                in_specs=[pl.BlockSpec((block_n, h, w, block_c),
                                       lambda ni, ci: (ni, 0, 0, ci))],
                out_specs=out_spec,
            ),
            compiler_params=cparams,
        )(x_nhwc)

    # Reorder each level's bins to PyTorch's (C, oh, ow) flatten order and drop
    # the channel padding (tiny, done on the pooled result).
    segs, off = [], 0
    for p in params:
        nb = p['out_h'] * p['out_w']
        seg = out[:, off:off + nb, :c]                       # (N, nb, C)
        segs.append(jnp.transpose(seg, (0, 2, 1)).reshape(n, c * nb))
        off += nb
    return jnp.concatenate(segs, axis=1)


# --------------------------------------------------------------------------
# Pure-JAX reference + self-test
# --------------------------------------------------------------------------

def _spp_reference(x, num_levels, pool_type):
    """Pure-JAX replica of the PyTorch forward (explicit pad + pool per level)."""
    n, c, h, w = x.shape
    params = _level_params(h, w, num_levels)
    outs = []
    for p in params:
        xp = jnp.pad(x, ((0, 0), (0, 0), (p['ph'], p['ph']), (p['pw'], p['pw'])))
        bins = []
        for oi in range(p['out_h']):
            for oj in range(p['out_w']):
                win = xp[:, :, oi * p['sh']:oi * p['sh'] + p['kh'],
                              oj * p['sw']:oj * p['sw'] + p['kw']]
                if pool_type == 'max_pool':
                    bins.append(jnp.max(win, axis=(2, 3)))
                else:
                    bins.append(jnp.mean(win, axis=(2, 3)))
        t = jnp.stack(bins, axis=-1)                         # (N, C, oh*ow)
        outs.append(t.reshape(n, -1))
    return jnp.concatenate(outs, axis=1)


if __name__ == "__main__":
    num_levels = 3                      # levels 1, 2, 4 -> 21 bins per channel
    spp = jax.jit(spp_layer, static_argnames=('num_levels', 'pool_type'))

    # Divisible spatial size (hierarchical max path, zero padding everywhere).
    N, C, H, W = 2, 4, 16, 16
    x = jax.random.normal(jax.random.PRNGKey(0), (N, C, H, W), dtype=jnp.float32)
    for pool_type in ('avg_pool', 'max_pool'):
        got = jax.block_until_ready(
            spp(x, num_levels=num_levels, pool_type=pool_type))
        want = _spp_reference(x, num_levels, pool_type)
        assert got.shape == want.shape == (N, C * 21), got.shape
        assert jnp.allclose(got, want, atol=1e-4, rtol=1e-4), pool_type

    # Non-divisible spatial size exercises the in-kernel ZeroPad2d handling
    # (nonzero padding + overlapping windows at the coarser levels).
    x2 = jax.random.normal(jax.random.PRNGKey(1), (2, 4, 15, 15),
                           dtype=jnp.float32)
    for pool_type in ('avg_pool', 'max_pool'):
        got2 = jax.block_until_ready(
            spp(x2, num_levels=num_levels, pool_type=pool_type))
        want2 = _spp_reference(x2, num_levels, pool_type)
        assert got2.shape == want2.shape
        assert jnp.allclose(got2, want2, atol=1e-4, rtol=1e-4), pool_type

    print("KERNEL_OK")
</pallas_src>

<mosaic_0001>
module attributes {stable_mosaic.version = 11 : i64} {
  func.func @_spp_avg_kernel(%arg0: i32, %arg1: i32, %arg2: memref<21x256xf32, #tpu.memory_space<vmem>>, %arg3: memref<1x256x128xf32, #tpu.memory_space<vmem>>, %arg4: memref<1x21x128xf32, #tpu.memory_space<vmem>>) attributes {dimension_semantics = [#tpu.dimension_semantics<parallel>, #tpu.dimension_semantics<parallel>], iteration_bounds = array<i64: 2, 1>, scalar_prefetch = 0 : i64, scratch_operands = 0 : i64, tpu.core_type = #tpu.core_type<tc>, window_params = [{pipeline_mode = #tpu.pipeline_mode<synchronous>, transform_indices = @transform_0, window_bounds = array<i64: 21, 256>}, {transform_indices = @transform_1, window_bounds = array<i64: 1, 256, 128>}, {transform_indices = @transform_2, window_bounds = array<i64: 1, 21, 128>}]} {
    %c0 = arith.constant 0 : index
    %c0_0 = arith.constant 0 : index
    %0 = vector.load %arg2[%c0, %c0_0] : memref<21x256xf32, #tpu.memory_space<vmem>>, vector<21x256xf32>
    %c0_1 = arith.constant 0 : index
    %c0_2 = arith.constant 0 : index
    %c0_3 = arith.constant 0 : index
    %1 = vector.load %arg3[%c0_1, %c0_2, %c0_3] : memref<1x256x128xf32, #tpu.memory_space<vmem>>, vector<1x256x128xf32>
    %2 = vector.shape_cast %1 : vector<1x256x128xf32> to vector<256x128xf32>
    %cst = arith.constant dense<0.000000e+00> : vector<21x128xf32>
    %3 = tpu.matmul %0, %2, %cst {dimension_numbers = #tpu.dot_dimension_numbers<[1], [0], [0], [1], [0, 0, 1, 1], [], []>, precision = #tpu.contract_precision<fp32>} : vector<21x256xf32>, vector<256x128xf32>, vector<21x128xf32> -> vector<21x128xf32>
    %c0_4 = arith.constant 0 : index
    %c0_5 = arith.constant 0 : index
    %c0_6 = arith.constant 0 : index
    %4 = vector.load %arg4[%c0_4, %c0_5, %c0_6] : memref<1x21x128xf32, #tpu.memory_space<vmem>>, vector<1x21x128xf32>
    %5 = vector.shape_cast %4 : vector<1x21x128xf32> to vector<21x128xf32>
    %6 = vector.shape_cast %3 : vector<21x128xf32> to vector<1x21x128xf32>
    tpu.vector_store %arg4[%c0_4, %c0_5, %c0_6], %6 {strides = array<i32>} : memref<1x21x128xf32, #tpu.memory_space<vmem>>, vector<1x21x128xf32>,
    return
  }
  func.func @transform_0(%arg0: i32, %arg1: i32) -> (i32, i32) {
    %c0_i32 = arith.constant 0 : i32
    %c0_i32_0 = arith.constant 0 : i32
    %c0_i32_1 = arith.constant 0 : i32
    return %c0_i32, %c0_i32_0 : i32, i32
  }
  func.func @transform_1(%arg0: i32, %arg1: i32) -> (i32, i32, i32) {
    %c0_i32 = arith.constant 0 : i32
    %c0_i32_0 = arith.constant 0 : i32
    return %arg0, %c0_i32, %arg1 : i32, i32, i32
  }
  func.func @transform_2(%arg0: i32, %arg1: i32) -> (i32, i32, i32) {
    %c0_i32 = arith.constant 0 : i32
    %c0_i32_0 = arith.constant 0 : i32
    return %arg0, %c0_i32, %arg1 : i32, i32, i32
  }
}

</mosaic_0001>

<llo_original>
// kernel: spp_layer.1
$region0: #{spp_layer.1}
  #allocation0 [shape = 'u32[]', space=smem, size = 0x4, offset = 0x4, fixed_abs, tag = 'smem constant byte address 0x4 - core index']
  #allocation1 [shape = 'u32[72,128]{1,0:T(1,128)}', space=vmem, size = 0x9000, scoped, tag = 'internal scratch']
  %s0 = inlined_call_operand.vmem [shape: f32[21,256], index: 0, kind: input, shape index: {}]
  %s1 = inlined_call_operand.vmem [shape: f32[2,256,128], index: 1, kind: input, shape index: {}]
  %s2 = inlined_call_operand.vmem [shape: f32[2,21,128], index: 2, kind: output, shape index: {}]
  %s3 = sld [smem:[#allocation0]]
  $region41: #{spp_layer.1} parent=0
    _
  %s5 = ssub.s32 1, %s3
  %s6 = scalar_select 0, %s5, %s3
  loop: start=0, step=1, limit=4
  $region2: #{spp_layer.1} parent=0 // loop_pre_header
    _
  $region3: #{spp_layer.1} parent=0 // loop_header
    %s8 = sphi 0, %s12
    %p9 = scmp.ge.s32.totalorder %s8, 4
    %s15 = sphi 0, %s27
    %s16 = sphi 0, %s23
    %s17 = sphi 0, %s15
    %s18 = sphi 0, %s16
    %s19 = sphi 0, %s17
    %s20 = sphi 0, %s18
    %s28 = sphi 0, %s28
    %s30 = sphi 0, %s28
    %s31 = sphi 0, %s30
    %s45 = sphi 0, %s31
    %s53 = sphi 0, %s55
    %s56 = sphi 0, %s53
    %s57 = sphi 0, %s56
    %s73 = sphi 0, %s57
    %s81 = sphi 0, %s83
    %s84 = sphi 0, %s81
    %s85 = sphi 0, %s84
    %s101 = sphi 0, %s85
  $region4: #{spp_layer.1} parent=0 // loop_header_branch
    %11 = sbr.rel (%p9) target = $region8
  $region5: #{spp_layer.1} parent=0 // loop_body
    %s13 = ssub.s32 %s8, 1
    %s14 = ssub.s32 %s8, 2
    %s21 = sadd.s32 1, %s16
    %p22 = scmp.ge.s32.totalorder %s21, 1
    %s23 = scalar_select %p22, 0, %s21
    %s24 = sadd.s32 1, %s15
    %s25 = scalar_select %p22, %s24, %s15
    %p26 = scmp.ge.s32.totalorder %s25, 2
    %s27 = scalar_select %p26, 0, %s25
    %s29 = sadd.s32 %s28, 1
    %p32 = scmp.eq.s32.totalorder %s8, 1
    %p33 = scmp.ne.s32.totalorder %s28, %s30
    %p34 = scmp.eq.s32.totalorder %s8, 0
    %p35 = por %p33, %p34
    %p36 = scmp.ne.s32.totalorder %s28, %s30
    %p37 = scmp.eq.s32.totalorder %s13, 1
    %p38 = por %p36, %p37
    %p39 = scmp.ne.s32.totalorder %s30, %s31
    %p40 = scmp.eq.s32.totalorder %s13, 0
    %p41 = por %p39, %p40
    %p42 = scmp.ne.s32.totalorder %s30, %s31
    %p43 = scmp.eq.s32.totalorder %s14, 1
    %p44 = por %p42, %p43
    %p46 = scmp.ne.s32.totalorder %s31, %s45
    %p47 = scmp.eq.s32.totalorder %s14, 0
    %p48 = por %p46, %p47
    %s49 = ssub.s32 %s15, %s27
    %s50 = ssub.s32 %s16, %s23
    %s51 = sor.u32 %s49, %s50
    %p52 = scmp.eq.s32.totalorder %s51, 0
    %s54 = sadd.s32 %s53, 1
    %s55 = scalar_select %p52, %s53, %s54
    %p58 = pneg %p52
    %p59 = scmp.eq.s32.totalorder %s8, 1
    %p60 = por %p58, %p59
    %p61 = scmp.ne.s32.totalorder %s53, %s56
    %p62 = scmp.eq.s32.totalorder %s8, 0
    %p63 = por %p61, %p62
    %p64 = scmp.ne.s32.totalorder %s53, %s56
    %p65 = scmp.eq.s32.totalorder %s13, 1
    %p66 = por %p64, %p65
    %p67 = scmp.ne.s32.totalorder %s56, %s57
    %p68 = scmp.eq.s32.totalorder %s13, 0
    %p69 = por %p67, %p68
    %p70 = scmp.ne.s32.totalorder %s56, %s57
    %p71 = scmp.eq.s32.totalorder %s14, 1
    %p72 = por %p70, %p71
    %p74 = scmp.ne.s32.totalorder %s57, %s73
    %p75 = scmp.eq.s32.totalorder %s14, 0
    %p76 = por %p74, %p75
    %s77 = ssub.s32 %s15, %s27
    %s78 = ssub.s32 %s16, %s23
    %s79 = sor.u32 %s77, %s78
    %p80 = scmp.eq.s32.totalorder %s79, 0
    %s82 = sadd.s32 %s81, 1
    %s83 = scalar_select %p80, %s81, %s82
    %p86 = pneg %p80
    %p87 = scmp.eq.s32.totalorder %s8, 1
    %p88 = por %p86, %p87
    %p89 = scmp.ne.s32.totalorder %s81, %s84
    %p90 = scmp.eq.s32.totalorder %s8, 0
    %p91 = por %p89, %p90
    %p92 = scmp.ne.s32.totalorder %s81, %s84
    %p93 = scmp.eq.s32.totalorder %s13, 1
    %p94 = por %p92, %p93
    %p95 = scmp.ne.s32.totalorder %s84, %s85
    %p96 = scmp.eq.s32.totalorder %s13, 0
    %p97 = por %p95, %p96
    %p98 = scmp.ne.s32.totalorder %s84, %s85
    %p99 = scmp.eq.s32.totalorder %s14, 1
    %p100 = por %p98, %p99
    %p102 = scmp.ne.s32.totalorder %s85, %s101
    %p103 = scmp.eq.s32.totalorder %s14, 0
    %p104 = por %p102, %p103
    %p105 = scmp.le.s32.totalorder 1, %s8
    %p106 = scmp.lt.s32.totalorder %s8, 3
    %p107 = pnand %p105, %p106
    %p108 = pneg %p107
    // Predicated region
    $region9: #{spp_layer.1} parent=5 // pred_check
      _
    $region10: #{spp_layer.1} parent=5 // pred_check_branch
      %110 = sbr.rel (%p107) target = $region12
    $region11: #{spp_layer.1} parent=5 // pred_region
      %s111 = ssub.s32 %s8, 1
      // Predicated region
      $region13: #{spp_layer.1} parent=11 // pred_check
        %p112 = pneg %p41
      $region14: #{spp_layer.1} parent=11 // pred_check_branch
        %114 = sbr.rel (%p112) target = $region16
      $region15: #{spp_layer.1} parent=11 // pred_region
        _
      $region16: #{spp_layer.1} parent=11 // pred_fallthru
        _
    $region12: #{spp_layer.1} parent=5 // pred_fallthru
      _
    %p115 = scmp.lt.s32.totalorder %s8, 2
    // Predicated region
    $region17: #{spp_layer.1} parent=5 // pred_check
      %p116 = pneg %p115
    $region18: #{spp_layer.1} parent=5 // pred_check_branch
      %118 = sbr.rel (%p116) target = $region20
    $region19: #{spp_layer.1} parent=5 // pred_region
      // Predicated region
      $region21: #{spp_layer.1} parent=19 // pred_check
        %p119 = pneg %p63
      $region22: #{spp_layer.1} parent=19 // pred_check_branch
        %121 = sbr.rel (%p119) target = $region24
      $region23: #{spp_layer.1} parent=19 // pred_region
        %p122 = scmp.lt.s32.totalorder %s15, 1
        %s123 = scalar_select %p122, %s15, 1
        %p124 = scmp.lt.s32.totalorder %s16, 0
        %s125 = scalar_select %p124, %s16, 0
        %s126 = smul.addr %s123, 32
        %s127 = sadd.s32 %s125, %s126
        %s128 = smul.addr %s127, 8
        %s129 = scalar_lea.vmem %s1, %s128
      $region24: #{spp_layer.1} parent=19 // pred_fallthru
        _
    $region20: #{spp_layer.1} parent=5 // pred_fallthru
      _
    %p130 = scmp.le.s32.totalorder 1, %s8
    %p131 = scmp.lt.s32.totalorder %s8, 3
    %p132 = pnand %p130, %p131
    %p133 = pneg %p132
    // Predicated region
    $region25: #{spp_layer.1} parent=5 // pred_check
      _
    $region26: #{spp_layer.1} parent=5 // pred_check_branch
      %135 = sbr.rel (%p132) target = $region28
    $region27: #{spp_layer.1} parent=5 // pred_region
      %s136 = ssub.s32 %s8, 1
      %p137 = pneg %p41
      %p138 = pneg %p38
      %p139 = scmp.lt.s32.totalorder %s17, 1
      %s140 = scalar_select %p139, %s17, 1
      %p141 = scmp.lt.s32.totalorder %s18, 0
      %s142 = scalar_select %p141, %s18, 0
      %s143 = smul.addr %s140, 32
      %s144 = sadd.s32 %s142, %s143
      %s145 = smul.addr %s144, 8
      %s146 = scalar_lea.vmem %s1, %s145
      %p147 = pneg %p69
      %p148 = pneg %p66
      %p149 = pneg %p97
      %p150 = pneg %p94
      %p151 = scmp.lt.s32.totalorder %s17, 1
      %s152 = scalar_select %p151, %s17, 1
      %p153 = scmp.lt.s32.totalorder %s18, 0
      %s154 = scalar_select %p153, %s18, 0
      %s155 = smul.addr %s152, 3
      %s156 = sadd.s32 %s154, %s155
      %s157 = smul.addr %s156, 8
      %s158 = scalar_lea.vmem %s2, %s157
      %p159 = scmp.lt.s32.totalorder %s17, 1
      %s160 = scalar_select %p159, %s17, 1
      %p161 = scmp.lt.s32.totalorder %s18, 0
      %s162 = scalar_select %p161, %s18, 0
      %s163 = smul.addr %s160, 32
      %s164 = sadd.s32 %s162, %s163
      %s165 = smul.addr %s164, 8
      %s166 = scalar_lea.vmem %s1, %s165
      %p167 = scmp.lt.s32.totalorder %s17, 1
      %s168 = scalar_select %p167, %s17, 1
      %p169 = scmp.lt.s32.totalorder %s18, 0
      %s170 = scalar_select %p169, %s18, 0
      %s171 = smul.addr %s168, 3
      %s172 = sadd.s32 %s170, %s171
      %s173 = smul.addr %s172, 8
      %s174 = scalar_lea.vmem %s2, %s173
      %v175 = vld [vmem:[%s0] sm:$0xff]
      %v176 = vld [vmem:[%s0 + $0x8] sm:$0xff]
      %v177 = vld [vmem:[%s0 + $0x10] sm:$0xff]
      %v178 = vld [vmem:[%s0 + $0x18] sm:$0xff]
      %v179 = vld [vmem:[%s0 + $0x20] sm:$0x1f]
      %v180 = vld [vmem:[%s0 + $0x28] sm:$0x1f]
      %v181 = vld [vmem:[%s166] sm:$0xff]
      %v182 = vld [vmem:[%s166 + $0x8] sm:$0xff]
      %v183 = vld [vmem:[%s166 + $0x10] sm:$0xff]
      %v184 = vld [vmem:[%s166 + $0x18] sm:$0xff]
      %v185 = vld [vmem:[%s166 + $0x20] sm:$0xff]
      %v186 = vld [vmem:[%s166 + $0x28] sm:$0xff]
      %v187 = vld [vmem:[%s166 + $0x30] sm:$0xff]
      %v188 = vld [vmem:[%s166 + $0x38] sm:$0xff]
      %v189 = vld [vmem:[%s166 + $0x40] sm:$0xff]
      %v190 = vld [vmem:[%s166 + $0x48] sm:$0xff]
      %v191 = vld [vmem:[%s166 + $0x50] sm:$0xff]
      %v192 = vld [vmem:[%s166 + $0x58] sm:$0xff]
      %v193 = vld [vmem:[%s166 + $0x60] sm:$0xff]
      %v194 = vld [vmem:[%s166 + $0x68] sm:$0xff]
      %v195 = vld [vmem:[%s166 + $0x70] sm:$0xff]
      %v196 = vld [vmem:[%s166 + $0x78] sm:$0xff]
      %v197 = vld [vmem:[%s166 + $0x80] sm:$0xff]
      %v198 = vld [vmem:[%s166 + $0x88] sm:$0xff]
      %v199 = vld [vmem:[%s166 + $0x90] sm:$0xff]
      %v200 = vld [vmem:[%s166 + $0x98] sm:$0xff]
      %v201 = vld [vmem:[%s166 + $0xa0] sm:$0xff]
      %v202 = vld [vmem:[%s166 + $0xa8] sm:$0xff]
      %v203 = vld [vmem:[%s166 + $0xb0] sm:$0xff]
      %v204 = vld [vmem:[%s166 + $0xb8] sm:$0xff]
      %v205 = vld [vmem:[%s166 + $0xc0] sm:$0xff]
      %v206 = vld [vmem:[%s166 + $0xc8] sm:$0xff]
      %v207 = vld [vmem:[%s166 + $0xd0] sm:$0xff]
      %v208 = vld [vmem:[%s166 + $0xd8] sm:$0xff]
      %v209 = vld [vmem:[%s166 + $0xe0] sm:$0xff]
      %v210 = vld [vmem:[%s166 + $0xe8] sm:$0xff]
      %v211 = vld [vmem:[%s166 + $0xf0] sm:$0xff]
      %v212 = vld [vmem:[%s166 + $0xf8] sm:$0xff]
      %v213 = vand.u32 %v196, 4294901760
      %214 = vmatpush.msra.mxu0 %v213
      %v215 = vand.u32 %v195, 4294901760
      %216 = vmatpush.msra.mxu0 %v215
      %v217 = vand.u32 %v194, 4294901760
      %218 = vmatpush.msra.mxu0 %v217
      %v219 = vand.u32 %v193, 4294901760
      %220 = vmatpush.msra.mxu0 %v219
      %v221 = vand.u32 %v192, 4294901760
      %222 = vmatpush.msra.mxu0 %v221
      %v223 = vand.u32 %v191, 4294901760
      %224 = vmatpush.msra.mxu0 %v223
      %v225 = vand.u32 %v190, 4294901760
      %226 = vmatpush.msra.mxu0 %v225
      %v227 = vand.u32 %v189, 4294901760
      %228 = vmatpush.msra.mxu0 %v227
      %v229 = vand.u32 %v188, 4294901760
      %230 = vmatpush.msra.mxu0 %v229
      %v231 = vand.u32 %v187, 4294901760
      %232 = vmatpush.msra.mxu0 %v231
      %v233 = vand.u32 %v186, 4294901760
      %234 = vmatpush.msra.mxu0 %v233
      %v235 = vand.u32 %v185, 4294901760
      %236 = vmatpush.msra.mxu0 %v235
      %v237 = vand.u32 %v184, 4294901760
      %238 = vmatpush.msra.mxu0 %v237
      %v239 = vand.u32 %v183, 4294901760
      %240 = vmatpush.msra.mxu0 %v239
      %v241 = vand.u32 %v182, 4294901760
      %242 = vmatpush.msra.mxu0 %v241
      %v243 = vand.u32 %v181, 4294901760
      %244 = vmatpush.msra.mxu0 %v243
      %v245 = vand.u32 %v175, 4294901760
      %v246 = vsub.f32 %v175, %v245
      %v247 = vand.u32 %v246, 4294901760
      %v248 = vsub.f32 %v246, %v247
      %v249 = vand.u32 %v248, 4294901760
      %250 = vmatmul.f32.gmra.mxu0 %v249
      %v251 = vpop.f32.mrf.mxu0
      %v252 = vadd.f32 0.0, %v251
      %v253 = vand.u32 %v177, 4294901760
      %v254 = vsub.f32 %v177, %v253
      %v255 = vand.u32 %v254, 4294901760
      %v256 = vsub.f32 %v254, %v255
      %v257 = vand.u32 %v256, 4294901760
      %258 = vmatmul.f32.gmra.mxu0 %v257
      %v259 = vpop.f32.mrf.mxu0
      %v260 = vadd.f32 0.0, %v259
      %v261 = vand.u32 %v179, 4294901760
      %v262 = vsub.f32 %v179, %v261
      %v263 = vand.u32 %v262, 4294901760
      %v264 = vsub.f32 %v262, %v263
      %v265 = vand.u32 %v264, 4294901760
      %266 = vmatmul.f32.gmra.mxu0 %v265
      %v267 = vpop.f32.mrf.mxu0
      %v268 = vadd.f32 0.0, %v267
      %269 = vdwg.mxu0
      %v270 = vand.u32 %v196, 4294901760
      %v271 = vsub.f32 %v196, %v270
      %v272 = vand.u32 %v271, 4294901760
      %v273 = vsub.f32 %v271, %v272
      %v274 = vand.u32 %v273, 4294901760
      %275 = vmatpush.msra.mxu0 %v274
      %v276 = vand.u32 %v195, 4294901760
      %v277 = vsub.f32 %v195, %v276
      %v278 = vand.u32 %v277, 4294901760
      %v279 = vsub.f32 %v277, %v278
      %v280 = vand.u32 %v279, 4294901760
      %281 = vmatpush.msra.mxu0 %v280
      %v282 = vand.u32 %v194, 4294901760
      %v283 = vsub.f32 %v194, %v282
      %v284 = vand.u32 %v283, 4294901760
      %v285 = vsub.f32 %v283, %v284
      %v286 = vand.u32 %v285, 4294901760
      %287 = vmatpush.msra.mxu0 %v286
      %v288 = vand.u32 %v193, 4294901760
      %v289 = vsub.f32 %v193, %v288
      %v290 = vand.u32 %v289, 4294901760
      %v291 = vsub.f32 %v289, %v290
      %v292 = vand.u32 %v291, 4294901760
      %293 = vmatpush.msra.mxu0 %v292
      %v294 = vand.u32 %v192, 4294901760
      %v295 = vsub.f32 %v192, %v294
      %v296 = vand.u32 %v295, 4294901760
      %v297 = vsub.f32 %v295, %v296
      %v298 = vand.u32 %v297, 4294901760
      %299 = vmatpush.msra.mxu0 %v298
      %v300 = vand.u32 %v191, 4294901760
      %v301 = vsub.f32 %v191, %v300
      %v302 = vand.u32 %v301, 4294901760
      %v303 = vsub.f32 %v301, %v302
      %v304 = vand.u32 %v303, 4294901760
      %305 = vmatpush.msra.mxu0 %v304
      %v306 = vand.u32 %v190, 4294901760
      %v307 = vsub.f32 %v190, %v306
      %v308 = vand.u32 %v307, 4294901760
      %v309 = vsub.f32 %v307, %v308
      %v310 = vand.u32 %v309, 4294901760
      %311 = vmatpush.msra.mxu0 %v310
      %v312 = vand.u32 %v189, 4294901760
      %v313 = vsub.f32 %v189, %v312
      %v314 = vand.u32 %v313, 4294901760
      %v315 = vsub.f32 %v313, %v314
      %v316 = vand.u32 %v315, 4294901760
      %317 = vmatpush.msra.mxu0 %v316
      %v318 = vand.u32 %v188, 4294901760
      %v319 = vsub.f32 %v188, %v318
      %v320 = vand.u32 %v319, 4294901760
      %v321 = vsub.f32 %v319, %v320
      %v322 = vand.u32 %v321, 4294901760
      %323 = vmatpush.msra.mxu0 %v322
      %v324 = vand.u32 %v187, 4294901760
      %v325 = vsub.f32 %v187, %v324
      %v326 = vand.u32 %v325, 4294901760
      %v327 = vsub.f32 %v325, %v326
      %v328 = vand.u32 %v327, 4294901760
      %329 = vmatpush.msra.mxu0 %v328
      %v330 = vand.u32 %v186, 4294901760
      %v331 = vsub.f32 %v186, %v330
      %v332 = vand.u32 %v331, 4294901760
      %v333 = vsub.f32 %v331, %v332
      %v334 = vand.u32 %v333, 4294901760
      %335 = vmatpush.msra.mxu0 %v334
      %v336 = vand.u32 %v185, 4294901760
      %v337 = vsub.f32 %v185, %v336
      %v338 = vand.u32 %v337, 4294901760
      %v339 = vsub.f32 %v337, %v338
      %v340 = vand.u32 %v339, 4294901760
      %341 = vmatpush.msra.mxu0 %v340
      %v342 = vand.u32 %v184, 4294901760
      %v343 = vsub.f32 %v184, %v342
      %v344 = vand.u32 %v343, 4294901760
      %v345 = vsub.f32 %v343, %v344
      %v346 = vand.u32 %v345, 4294901760
      %347 = vmatpush.msra.mxu0 %v346
      %v348 = vand.u32 %v183, 4294901760
      %v349 = vsub.f32 %v183, %v348
      %v350 = vand.u32 %v349, 4294901760
      %v351 = vsub.f32 %v349, %v350
      %v352 = vand.u32 %v351, 4294901760
      %353 = vmatpush.msra.mxu0 %v352
      %v354 = vand.u32 %v182, 4294901760
      %v355 = vsub.f32 %v182, %v354
      %v356 = vand.u32 %v355, 4294901760
      %v357 = vsub.f32 %v355, %v356
      %v358 = vand.u32 %v357, 4294901760
      %359 = vmatpush.msra.mxu0 %v358
      %v360 = vand.u32 %v181, 4294901760
      %v361 = vsub.f32 %v181, %v360
      %v362 = vand.u32 %v361, 4294901760
      %v363 = vsub.f32 %v361, %v362
      %v364 = vand.u32 %v363, 4294901760
      %365 = vmatpush.msra.mxu0 %v364
      %v366 = vand.u32 %v175, 4294901760
      %367 = vmatmul.f32.gmra.mxu0 %v366
      %v368 = vpop.f32.mrf.mxu0
      %v369 = vadd.f32 %v252, %v368
      %v370 = vand.u32 %v177, 4294901760
      %371 = vmatmul.f32.gmra.mxu0 %v370
      %v372 = vpop.f32.mrf.mxu0
      %v373 = vadd.f32 %v260, %v372
      %v374 = vand.u32 %v179, 4294901760
      %375 = vmatmul.f32.gmra.mxu0 %v374
      %v376 = vpop.f32.mrf.mxu0
      %v377 = vadd.f32 %v268, %v376
      %378 = vdwg.mxu0
      %v379 = vand.u32 %v196, 4294901760
      %v380 = vsub.f32 %v196, %v379
      %381 = vmatpush.msra.mxu0 %v380
      %v382 = vand.u32 %v195, 4294901760
      %v383 = vsub.f32 %v195, %v382
      %384 = vmatpush.msra.mxu0 %v383
      %v385 = vand.u32 %v194, 4294901760
      %v386 = vsub.f32 %v194, %v385
      %387 = vmatpush.msra.mxu0 %v386
      %v388 = vand.u32 %v193, 4294901760
      %v389 = vsub.f32 %v193, %v388
      %390 = vmatpush.msra.mxu0 %v389
      %v391 = vand.u32 %v192, 4294901760
      %v392 = vsub.f32 %v192, %v391
      %393 = vmatpush.msra.mxu0 %v392
      %v394 = vand.u32 %v191, 4294901760
      %v395 = vsub.f32 %v191, %v394
      %396 = vmatpush.msra.mxu0 %v395
      %v397 = vand.u32 %v190, 4294901760
      %v398 = vsub.f32 %v190, %v397
      %399 = vmatpush.msra.mxu0 %v398
      %v400 = vand.u32 %v189, 4294901760
      %v401 = vsub.f32 %v189, %v400
      %402 = vmatpush.msra.mxu0 %v401
      %v403 = vand.u32 %v188, 4294901760
      %v404 = vsub.f32 %v188, %v403
      %405 = vmatpush.msra.mxu0 %v404
      %v406 = vand.u32 %v187, 4294901760
      %v407 = vsub.f32 %v187, %v406
      %408 = vmatpush.msra.mxu0 %v407
      %v409 = vand.u32 %v186, 4294901760
      %v410 = vsub.f32 %v186, %v409
      %411 = vmatpush.msra.mxu0 %v410
      %v412 = vand.u32 %v185, 4294901760
      %v413 = vsub.f32 %v185, %v412
      %414 = vmatpush.msra.mxu0 %v413
      %v415 = vand.u32 %v184, 4294901760
      %v416 = vsub.f32 %v184, %v415
      %417 = vmatpush.msra.mxu0 %v416
      %v418 = vand.u32 %v183, 4294901760
      %v419 = vsub.f32 %v183, %v418
      %420 = vmatpush.msra.mxu0 %v419
      %v421 = vand.u32 %v182, 4294901760
      %v422 = vsub.f32 %v182, %v421
      %423 = vmatpush.msra.mxu0 %v422
      %v424 = vand.u32 %v181, 4294901760
      %v425 = vsub.f32 %v181, %v424
      %426 = vmatpush.msra.mxu0 %v425
      %v427 = vand.u32 %v175, 4294901760
      %v428 = vsub.f32 %v175, %v427
      %429 = vmatmul.f32.gmra.mxu0 %v428
      %v430 = vpop.f32.mrf.mxu0
      %v431 = vadd.f32 %v369, %v430
      %v432 = vand.u32 %v177, 4294901760
      %v433 = vsub.f32 %v177, %v432
      %434 = vmatmul.f32.gmra.mxu0 %v433
      %v435 = vpop.f32.mrf.mxu0
      %v436 = vadd.f32 %v373, %v435
      %v437 = vand.u32 %v179, 4294901760
      %v438 = vsub.f32 %v179, %v437
      %439 = vmatmul.f32.gmra.mxu0 %v438
      %v440 = vpop.f32.mrf.mxu0
      %v441 = vadd.f32 %v377, %v440
      %442 = vdwg.mxu0
      %v443 = vand.u32 %v196, 4294901760
      %444 = vmatpush.msra.mxu0 %v443
      %v445 = vand.u32 %v195, 4294901760
      %446 = vmatpush.msra.mxu0 %v445
      %v447 = vand.u32 %v194, 4294901760
      %448 = vmatpush.msra.mxu0 %v447
      %v449 = vand.u32 %v193, 4294901760
      %450 = vmatpush.msra.mxu0 %v449
      %v451 = vand.u32 %v192, 4294901760
      %452 = vmatpush.msra.mxu0 %v451
      %v453 = vand.u32 %v191, 4294901760
      %454 = vmatpush.msra.mxu0 %v453
      %v455 = vand.u32 %v190, 4294901760
      %456 = vmatpush.msra.mxu0 %v455
      %v457 = vand.u32 %v189, 4294901760
      %458 = vmatpush.msra.mxu0 %v457
      %v459 = vand.u32 %v188, 4294901760
      %460 = vmatpush.msra.mxu0 %v459
      %v461 = vand.u32 %v187, 4294901760
      %462 = vmatpush.msra.mxu0 %v461
      %v463 = vand.u32 %v186, 4294901760
      %464 = vmatpush.msra.mxu0 %v463
      %v465 = vand.u32 %v185, 4294901760
      %466 = vmatpush.msra.mxu0 %v465
      %v467 = vand.u32 %v184, 4294901760
      %468 = vmatpush.msra.mxu0 %v467
      %v469 = vand.u32 %v183, 4294901760
      %470 = vmatpush.msra.mxu0 %v469
      %v471 = vand.u32 %v182, 4294901760
      %472 = vmatpush.msra.mxu0 %v471
      %v473 = vand.u32 %v181, 4294901760
      %474 = vmatpush.msra.mxu0 %v473
      %v475 = vand.u32 %v175, 4294901760
      %v476 = vsub.f32 %v175, %v475
      %v477 = vand.u32 %v476, 4294901760
      %478 = vmatmul.f32.gmra.mxu0 %v477
      %v479 = vpop.f32.mrf.mxu0
      %v480 = vadd.f32 %v431, %v479
      %v481 = vand.u32 %v177, 4294901760
      %v482 = vsub.f32 %v177, %v481
      %v483 = vand.u32 %v482, 4294901760
      %484 = vmatmul.f32.gmra.mxu0 %v483
      %v485 = vpop.f32.mrf.mxu0
      %v486 = vadd.f32 %v436, %v485
      %v487 = vand.u32 %v179, 4294901760
      %v488 = vsub.f32 %v179, %v487
      %v489 = vand.u32 %v488, 4294901760
      %490 = vmatmul.f32.gmra.mxu0 %v489
      %v491 = vpop.f32.mrf.mxu0
      %v492 = vadd.f32 %v441, %v491
      %493 = vdwg.mxu0
      %v494 = vand.u32 %v196, 4294901760
      %v495 = vsub.f32 %v196, %v494
      %v496 = vand.u32 %v495, 4294901760
      %497 = vmatpush.msra.mxu0 %v496
      %v498 = vand.u32 %v195, 4294901760
      %v499 = vsub.f32 %v195, %v498
      %v500 = vand.u32 %v499, 4294901760
      %501 = vmatpush.msra.mxu0 %v500
      %v502 = vand.u32 %v194, 4294901760
      %v503 = vsub.f32 %v194, %v502
      %v504 = vand.u32 %v503, 4294901760
      %505 = vmatpush.msra.mxu0 %v504
      %v506 = vand.u32 %v193, 4294901760
      %v507 = vsub.f32 %v193, %v506
      %v508 = vand.u32 %v507, 4294901760
      %509 = vmatpush.msra.mxu0 %v508
      %v510 = vand.u32 %v192, 4294901760
      %v511 = vsub.f32 %v192, %v510
      %v512 = vand.u32 %v511, 4294901760
      %513 = vmatpush.msra.mxu0 %v512
      %v514 = vand.u32 %v191, 4294901760
      %v515 = vsub.f32 %v191, %v514
      %v516 = vand.u32 %v515, 4294901760
      %517 = vmatpush.msra.mxu0 %v516
      %v518 = vand.u32 %v190, 4294901760
      %v519 = vsub.f32 %v190, %v518
      %v520 = vand.u32 %v519, 4294901760
      %521 = vmatpush.msra.mxu0 %v520
      %v522 = vand.u32 %v189, 4294901760
      %v523 = vsub.f32 %v189, %v522
      %v524 = vand.u32 %v523, 4294901760
      %525 = vmatpush.msra.mxu0 %v524
      %v526 = vand.u32 %v188, 4294901760
      %v527 = vsub.f32 %v188, %v526
      %v528 = vand.u32 %v527, 4294901760
      %529 = vmatpush.msra.mxu0 %v528
      %v530 = vand.u32 %v187, 4294901760
      %v531 = vsub.f32 %v187, %v530
      %v532 = vand.u32 %v531, 4294901760
      %533 = vmatpush.msra.mxu0 %v532
      %v534 = vand.u32 %v186, 4294901760
      %v535 = vsub.f32 %v186, %v534
      %v536 = vand.u32 %v535, 4294901760
      %537 = vmatpush.msra.mxu0 %v536
      %v538 = vand.u32 %v185, 4294901760
      %v539 = vsub.f32 %v185, %v538
      %v540 = vand.u32 %v539, 4294901760
      %541 = vmatpush.msra.mxu0 %v540
      %v542 = vand.u32 %v184, 4294901760
      %v543 = vsub.f32 %v184, %v542
      %v544 = vand.u32 %v543, 4294901760
      %545 = vmatpush.msra.mxu0 %v544
      %v546 = vand.u32 %v183, 4294901760
      %v547 = vsub.f32 %v183, %v546
      %v548 = vand.u32 %v547, 4294901760
      %549 = vmatpush.msra.mxu0 %v548
      %v550 = vand.u32 %v182, 4294901760
      %v551 = vsub.f32 %v182, %v550
      %v552 = vand.u32 %v551, 4294901760
      %553 = vmatpush.msra.mxu0 %v552
      %v554 = vand.u32 %v181, 4294901760
      %v555 = vsub.f32 %v181, %v554
      %v556 = vand.u32 %v555, 4294901760
      %557 = vmatpush.msra.mxu0 %v556
      %v558 = vand.u32 %v175, 4294901760
      %559 = vmatmul.f32.gmra.mxu0 %v558
      %v560 = vpop.f32.mrf.mxu0
      %v561 = vadd.f32 %v480, %v560
      %v562 = vand.u32 %v177, 4294901760
      %563 = vmatmul.f32.gmra.mxu0 %v562
      %v564 = vpop.f32.mrf.mxu0
      %v565 = vadd.f32 %v486, %v564
      %v566 = vand.u32 %v179, 4294901760
      %567 = vmatmul.f32.gmra.mxu0 %v566
      %v568 = vpop.f32.mrf.mxu0
      %v569 = vadd.f32 %v492, %v568
      %570 = vdwg.mxu0
      %v571 = vand.u32 %v196, 4294901760
      %572 = vmatpush.msra.mxu0 %v571
      %v573 = vand.u32 %v195, 4294901760
      %574 = vmatpush.msra.mxu0 %v573
      %v575 = vand.u32 %v194, 4294901760
      %576 = vmatpush.msra.mxu0 %v575
      %v577 = vand.u32 %v193, 4294901760
      %578 = vmatpush.msra.mxu0 %v577
      %v579 = vand.u32 %v192, 4294901760
      %580 = vmatpush.msra.mxu0 %v579
      %v581 = vand.u32 %v191, 4294901760
      %582 = vmatpush.msra.mxu0 %v581
      %v583 = vand.u32 %v190, 4294901760
      %584 = vmatpush.msra.mxu0 %v583
      %v585 = vand.u32 %v189, 4294901760
      %586 = vmatpush.msra.mxu0 %v585
      %v587 = vand.u32 %v188, 4294901760
      %588 = vmatpush.msra.mxu0 %v587
      %v589 = vand.u32 %v187, 4294901760
      %590 = vmatpush.msra.mxu0 %v589
      %v591 = vand.u32 %v186, 4294901760
      %592 = vmatpush.msra.mxu0 %v591
      %v593 = vand.u32 %v185, 4294901760
      %594 = vmatpush.msra.mxu0 %v593
      %v595 = vand.u32 %v184, 4294901760
      %596 = vmatpush.msra.mxu0 %v595
      %v597 = vand.u32 %v183, 4294901760
      %598 = vmatpush.msra.mxu0 %v597
      %v599 = vand.u32 %v182, 4294901760
      %600 = vmatpush.msra.mxu0 %v599
      %v601 = vand.u32 %v181, 4294901760
      %602 = vmatpush.msra.mxu0 %v601
      %v603 = vand.u32 %v175, 4294901760
      %604 = vmatmul.f32.gmra.mxu0 %v603
      %v605 = vpop.f32.mrf.mxu0
      %v606 = vadd.f32 %v561, %v605
      %v607 = vand.u32 %v177, 4294901760
      %608 = vmatmul.f32.gmra.mxu0 %v607
      %v609 = vpop.f32.mrf.mxu0
      %v610 = vadd.f32 %v565, %v609
      %v611 = vand.u32 %v179, 4294901760
      %612 = vmatmul.f32.gmra.mxu0 %v611
      %v613 = vpop.f32.mrf.mxu0
      %v614 = vadd.f32 %v569, %v613
      %615 = vdwg.mxu0
      %v616 = vand.u32 %v212, 4294901760
      %617 = vmatpush.msra.mxu0 %v616
      %v618 = vand.u32 %v211, 4294901760
      %619 = vmatpush.msra.mxu0 %v618
      %v620 = vand.u32 %v210, 4294901760
      %621 = vmatpush.msra.mxu0 %v620
      %v622 = vand.u32 %v209, 4294901760
      %623 = vmatpush.msra.mxu0 %v622
      %v624 = vand.u32 %v208, 4294901760
      %625 = vmatpush.msra.mxu0 %v624
      %v626 = vand.u32 %v207, 4294901760
      %627 = vmatpush.msra.mxu0 %v626
      %v628 = vand.u32 %v206, 4294901760
      %629 = vmatpush.msra.mxu0 %v628
      %v630 = vand.u32 %v205, 4294901760
      %631 = vmatpush.msra.mxu0 %v630
      %v632 = vand.u32 %v204, 4294901760
      %633 = vmatpush.msra.mxu0 %v632
      %v634 = vand.u32 %v203, 4294901760
      %635 = vmatpush.msra.mxu0 %v634
      %v636 = vand.u32 %v202, 4294901760
      %637 = vmatpush.msra.mxu0 %v636
      %v638 = vand.u32 %v201, 4294901760
      %639 = vmatpush.msra.mxu0 %v638
      %v640 = vand.u32 %v200, 4294901760
      %641 = vmatpush.msra.mxu0 %v640
      %v642 = vand.u32 %v199, 4294901760
      %643 = vmatpush.msra.mxu0 %v642
      %v644 = vand.u32 %v198, 4294901760
      %645 = vmatpush.msra.mxu0 %v644
      %v646 = vand.u32 %v197, 4294901760
      %647 = vmatpush.msra.mxu0 %v646
      %v648 = vand.u32 %v176, 4294901760
      %v649 = vsub.f32 %v176, %v648
      %v650 = vand.u32 %v649, 4294901760
      %v651 = vsub.f32 %v649, %v650
      %v652 = vand.u32 %v651, 4294901760
      %653 = vmatmul.f32.gmra.mxu0 %v652
      %v654 = vpop.f32.mrf.mxu0
      %v655 = vadd.f32 %v606, %v654
      %v656 = vand.u32 %v178, 4294901760
      %v657 = vsub.f32 %v178, %v656
      %v658 = vand.u32 %v657, 4294901760
      %v659 = vsub.f32 %v657, %v658
      %v660 = vand.u32 %v659, 4294901760
      %661 = vmatmul.f32.gmra.mxu0 %v660
      %v662 = vpop.f32.mrf.mxu0
      %v663 = vadd.f32 %v610, %v662
      %v664 = vand.u32 %v180, 4294901760
      %v665 = vsub.f32 %v180, %v664
      %v666 = vand.u32 %v665, 4294901760
      %v667 = vsub.f32 %v665, %v666
      %v668 = vand.u32 %v667, 4294901760
      %669 = vmatmul.f32.gmra.mxu0 %v668
      %v670 = vpop.f32.mrf.mxu0
      %v671 = vadd.f32 %v614, %v670
      %672 = vdwg.mxu0
      %v673 = vand.u32 %v212, 4294901760
      %v674 = vsub.f32 %v212, %v673
      %v675 = vand.u32 %v674, 4294901760
      %v676 = vsub.f32 %v674, %v675
      %v677 = vand.u32 %v676, 4294901760
      %678 = vmatpush.msra.mxu0 %v677
      %v679 = vand.u32 %v211, 4294901760
      %v680 = vsub.f32 %v211, %v679
      %v681 = vand.u32 %v680, 4294901760
      %v682 = vsub.f32 %v680, %v681
      %v683 = vand.u32 %v682, 4294901760
      %684 = vmatpush.msra.mxu0 %v683
      %v685 = vand.u32 %v210, 4294901760
      %v686 = vsub.f32 %v210, %v685
      %v687 = vand.u32 %v686, 4294901760
      %v688 = vsub.f32 %v686, %v687
      %v689 = vand.u32 %v688, 4294901760
      %690 = vmatpush.msra.mxu0 %v689
      %v691 = vand.u32 %v209, 4294901760
      %v692 = vsub.f32 %v209, %v691
      %v693 = vand.u32 %v692, 4294901760
      %v694 = vsub.f32 %v692, %v693
      %v695 = vand.u32 %v694, 4294901760
      %696 = vmatpush.msra.mxu0 %v695
      %v697 = vand.u32 %v208, 4294901760
      %v698 = vsub.f32 %v208, %v697
      %v699 = vand.u32 %v698, 4294901760
      %v700 = vsub.f32 %v698, %v699
      %v701 = vand.u32 %v700, 4294901760
      %702 = vmatpush.msra.mxu0 %v701
      %v703 = vand.u32 %v207, 4294901760
      %v704 = vsub.f32 %v207, %v703
      %v705 = vand.u32 %v704, 4294901760
      %v706 = vsub.f32 %v704, %v705
      %v707 = vand.u32 %v706, 4294901760
      %708 = vmatpush.msra.mxu0 %v707
      %v709 = vand.u32 %v206, 4294901760
      %v710 = vsub.f32 %v206, %v709
      %v711 = vand.u32 %v710, 4294901760
      %v712 = vsub.f32 %v710, %v711
      %v713 = vand.u32 %v712, 4294901760
      %714 = vmatpush.msra.mxu0 %v713
      %v715 = vand.u32 %v205, 4294901760
      %v716 = vsub.f32 %v205, %v715
      %v717 = vand.u32 %v716, 4294901760
      %v718 = vsub.f32 %v716, %v717
      %v719 = vand.u32 %v718, 4294901760
      %720 = vmatpush.msra.mxu0 %v719
      %v721 = vand.u32 %v204, 4294901760
      %v722 = vsub.f32 %v204, %v721
      %v723 = vand.u32 %v722, 4294901760
      %v724 = vsub.f32 %v722, %v723
      %v725 = vand.u32 %v724, 4294901760
      %726 = vmatpush.msra.mxu0 %v725
      %v727 = vand.u32 %v203, 4294901760
      %v728 = vsub.f32 %v203, %v727
      %v729 = vand.u32 %v728, 4294901760
      %v730 = vsub.f32 %v728, %v729
      %v731 = vand.u32 %v730, 4294901760
      %732 = vmatpush.msra.mxu0 %v731
      %v733 = vand.u32 %v202, 4294901760
      %v734 = vsub.f32 %v202, %v733
      %v735 = vand.u32 %v734, 4294901760
      %v736 = vsub.f32 %v734, %v735
      %v737 = vand.u32 %v736, 4294901760
      %738 = vmatpush.msra.mxu0 %v737
      %v739 = vand.u32 %v201, 4294901760
      %v740 = vsub.f32 %v201, %v739
      %v741 = vand.u32 %v740, 4294901760
      %v742 = vsub.f32 %v740, %v741
      %v743 = vand.u32 %v742, 4294901760
      %744 = vmatpush.msra.mxu0 %v743
      %v745 = vand.u32 %v200, 4294901760
      %v746 = vsub.f32 %v200, %v745
      %v747 = vand.u32 %v746, 4294901760
      %v748 = vsub.f32 %v746, %v747
      %v749 = vand.u32 %v748, 4294901760
      %750 = vmatpush.msra.mxu0 %v749
      %v751 = vand.u32 %v199, 4294901760
      %v752 = vsub.f32 %v199, %v751
      %v753 = vand.u32 %v752, 4294901760
      %v754 = vsub.f32 %v752, %v753
      %v755 = vand.u32 %v754, 4294901760
      %756 = vmatpush.msra.mxu0 %v755
      %v757 = vand.u32 %v198, 4294901760
      %v758 = vsub.f32 %v198, %v757
      %v759 = vand.u32 %v758, 4294901760
      %v760 = vsub.f32 %v758, %v759
      %v761 = vand.u32 %v760, 4294901760
      %762 = vmatpush.msra.mxu0 %v761
      %v763 = vand.u32 %v197, 4294901760
      %v764 = vsub.f32 %v197, %v763
      %v765 = vand.u32 %v764, 4294901760
      %v766 = vsub.f32 %v764, %v765
      %v767 = vand.u32 %v766, 4294901760
      %768 = vmatpush.msra.mxu0 %v767
      %v769 = vand.u32 %v176, 4294901760
      %770 = vmatmul.f32.gmra.mxu0 %v769
      %v771 = vpop.f32.mrf.mxu0
      %v772 = vadd.f32 %v655, %v771
      %v773 = vand.u32 %v178, 4294901760
      %774 = vmatmul.f32.gmra.mxu0 %v773
      %v775 = vpop.f32.mrf.mxu0
      %v776 = vadd.f32 %v663, %v775
      %v777 = vand.u32 %v180, 4294901760
      %778 = vmatmul.f32.gmra.mxu0 %v777
      %v779 = vpop.f32.mrf.mxu0
      %v780 = vadd.f32 %v671, %v779
      %781 = vdwg.mxu0
      %v782 = vand.u32 %v212, 4294901760
      %v783 = vsub.f32 %v212, %v782
      %784 = vmatpush.msra.mxu0 %v783
      %v785 = vand.u32 %v211, 4294901760
      %v786 = vsub.f32 %v211, %v785
      %787 = vmatpush.msra.mxu0 %v786
      %v788 = vand.u32 %v210, 4294901760
      %v789 = vsub.f32 %v210, %v788
      %790 = vmatpush.msra.mxu0 %v789
      %v791 = vand.u32 %v209, 4294901760
      %v792 = vsub.f32 %v209, %v791
      %793 = vmatpush.msra.mxu0 %v792
      %v794 = vand.u32 %v208, 4294901760
      %v795 = vsub.f32 %v208, %v794
      %796 = vmatpush.msra.mxu0 %v795
      %v797 = vand.u32 %v207, 4294901760
      %v798 = vsub.f32 %v207, %v797
      %799 = vmatpush.msra.mxu0 %v798
      %v800 = vand.u32 %v206, 4294901760
      %v801 = vsub.f32 %v206, %v800
      %802 = vmatpush.msra.mxu0 %v801
      %v803 = vand.u32 %v205, 4294901760
      %v804 = vsub.f32 %v205, %v803
      %805 = vmatpush.msra.mxu0 %v804
      %v806 = vand.u32 %v204, 4294901760
      %v807 = vsub.f32 %v204, %v806
      %808 = vmatpush.msra.mxu0 %v807
      %v809 = vand.u32 %v203, 4294901760
      %v810 = vsub.f32 %v203, %v809
      %811 = vmatpush.msra.mxu0 %v810
      %v812 = vand.u32 %v202, 4294901760
      %v813 = vsub.f32 %v202, %v812
      %814 = vmatpush.msra.mxu0 %v813
      %v815 = vand.u32 %v201, 4294901760
      %v816 = vsub.f32 %v201, %v815
      %817 = vmatpush.msra.mxu0 %v816
      %v818 = vand.u32 %v200, 4294901760
      %v819 = vsub.f32 %v200, %v818
      %820 = vmatpush.msra.mxu0 %v819
      %v821 = vand.u32 %v199, 4294901760
      %v822 = vsub.f32 %v199, %v821
      %823 = vmatpush.msra.mxu0 %v822
      %v824 = vand.u32 %v198, 4294901760
      %v825 = vsub.f32 %v198, %v824
      %826 = vmatpush.msra.mxu0 %v825
      %v827 = vand.u32 %v197, 4294901760
      %v828 = vsub.f32 %v197, %v827
      %829 = vmatpush.msra.mxu0 %v828
      %v830 = vand.u32 %v176, 4294901760
      %v831 = vsub.f32 %v176, %v830
      %832 = vmatmul.f32.gmra.mxu0 %v831
      %v833 = vpop.f32.mrf.mxu0
      %v834 = vadd.f32 %v772, %v833
      %v835 = vand.u32 %v178, 4294901760
      %v836 = vsub.f32 %v178, %v835
      %837 = vmatmul.f32.gmra.mxu0 %v836
      %v838 = vpop.f32.mrf.mxu0
      %v839 = vadd.f32 %v776, %v838
      %v840 = vand.u32 %v180, 4294901760
      %v841 = vsub.f32 %v180, %v840
      %842 = vmatmul.f32.gmra.mxu0 %v841
      %v843 = vpop.f32.mrf.mxu0
      %v844 = vadd.f32 %v780, %v843
      %845 = vdwg.mxu0
      %v846 = vand.u32 %v212, 4294901760
      %847 = vmatpush.msra.mxu0 %v846
      %v848 = vand.u32 %v211, 4294901760
      %849 = vmatpush.msra.mxu0 %v848
      %v850 = vand.u32 %v210, 4294901760
      %851 = vmatpush.msra.mxu0 %v850
      %v852 = vand.u32 %v209, 4294901760
      %853 = vmatpush.msra.mxu0 %v852
      %v854 = vand.u32 %v208, 4294901760
      %855 = vmatpush.msra.mxu0 %v854
      %v856 = vand.u32 %v207, 4294901760
      %857 = vmatpush.msra.mxu0 %v856
      %v858 = vand.u32 %v206, 4294901760
      %859 = vmatpush.msra.mxu0 %v858
      %v860 = vand.u32 %v205, 4294901760
      %861 = vmatpush.msra.mxu0 %v860
      %v862 = vand.u32 %v204, 4294901760
      %863 = vmatpush.msra.mxu0 %v862
      %v864 = vand.u32 %v203, 4294901760
      %865 = vmatpush.msra.mxu0 %v864
      %v866 = vand.u32 %v202, 4294901760
      %867 = vmatpush.msra.mxu0 %v866
      %v868 = vand.u32 %v201, 4294901760
      %869 = vmatpush.msra.mxu0 %v868
      %v870 = vand.u32 %v200, 4294901760
      %871 = vmatpush.msra.mxu0 %v870
      %v872 = vand.u32 %v199, 4294901760
      %873 = vmatpush.msra.mxu0 %v872
      %v874 = vand.u32 %v198, 4294901760
      %875 = vmatpush.msra.mxu0 %v874
      %v876 = vand.u32 %v197, 4294901760
      %877 = vmatpush.msra.mxu0 %v876
      %v878 = vand.u32 %v176, 4294901760
      %v879 = vsub.f32 %v176, %v878
      %v880 = vand.u32 %v879, 4294901760
      %881 = vmatmul.f32.gmra.mxu0 %v880
      %v882 = vpop.f32.mrf.mxu0
      %v883 = vadd.f32 %v834, %v882
      %v884 = vand.u32 %v178, 4294901760
      %v885 = vsub.f32 %v178, %v884
      %v886 = vand.u32 %v885, 4294901760
      %887 = vmatmul.f32.gmra.mxu0 %v886
      %v888 = vpop.f32.mrf.mxu0
      %v889 = vadd.f32 %v839, %v888
      %v890 = vand.u32 %v180, 4294901760
      %v891 = vsub.f32 %v180, %v890
      %v892 = vand.u32 %v891, 4294901760
      %893 = vmatmul.f32.gmra.mxu0 %v892
      %v894 = vpop.f32.mrf.mxu0
      %v895 = vadd.f32 %v844, %v894
      %896 = vdwg.mxu0
      %v897 = vand.u32 %v212, 4294901760
      %v898 = vsub.f32 %v212, %v897
      %v899 = vand.u32 %v898, 4294901760
      %900 = vmatpush.msra.mxu0 %v899
      %v901 = vand.u32 %v211, 4294901760
      %v902 = vsub.f32 %v211, %v901
      %v903 = vand.u32 %v902, 4294901760
      %904 = vmatpush.msra.mxu0 %v903
      %v905 = vand.u32 %v210, 4294901760
      %v906 = vsub.f32 %v210, %v905
      %v907 = vand.u32 %v906, 4294901760
      %908 = vmatpush.msra.mxu0 %v907
      %v909 = vand.u32 %v209, 4294901760
      %v910 = vsub.f32 %v209, %v909
      %v911 = vand.u32 %v910, 4294901760
      %912 = vmatpush.msra.mxu0 %v911
      %v913 = vand.u32 %v208, 4294901760
      %v914 = vsub.f32 %v208, %v913
      %v915 = vand.u32 %v914, 4294901760
      %916 = vmatpush.msra.mxu0 %v915
      %v917 = vand.u32 %v207, 4294901760
      %v918 = vsub.f32 %v207, %v917
      %v919 = vand.u32 %v918, 4294901760
      %920 = vmatpush.msra.mxu0 %v919
      %v921 = vand.u32 %v206, 4294901760
      %v922 = vsub.f32 %v206, %v921
      %v923 = vand.u32 %v922, 4294901760
      %924 = vmatpush.msra.mxu0 %v923
      %v925 = vand.u32 %v205, 4294901760
      %v926 = vsub.f32 %v205, %v925
      %v927 = vand.u32 %v926, 4294901760
      %928 = vmatpush.msra.mxu0 %v927
      %v929 = vand.u32 %v204, 4294901760
      %v930 = vsub.f32 %v204, %v929
      %v931 = vand.u32 %v930, 4294901760
      %932 = vmatpush.msra.mxu0 %v931
      %v933 = vand.u32 %v203, 4294901760
      %v934 = vsub.f32 %v203, %v933
      %v935 = vand.u32 %v934, 4294901760
      %936 = vmatpush.msra.mxu0 %v935
      %v937 = vand.u32 %v202, 4294901760
      %v938 = vsub.f32 %v202, %v937
      %v939 = vand.u32 %v938, 4294901760
      %940 = vmatpush.msra.mxu0 %v939
      %v941 = vand.u32 %v201, 4294901760
      %v942 = vsub.f32 %v201, %v941
      %v943 = vand.u32 %v942, 4294901760
      %944 = vmatpush.msra.mxu0 %v943
      %v945 = vand.u32 %v200, 4294901760
      %v946 = vsub.f32 %v200, %v945
      %v947 = vand.u32 %v946, 4294901760
      %948 = vmatpush.msra.mxu0 %v947
      %v949 = vand.u32 %v199, 4294901760
      %v950 = vsub.f32 %v199, %v949
      %v951 = vand.u32 %v950, 4294901760
      %952 = vmatpush.msra.mxu0 %v951
      %v953 = vand.u32 %v198, 4294901760
      %v954 = vsub.f32 %v198, %v953
      %v955 = vand.u32 %v954, 4294901760
      %956 = vmatpush.msra.mxu0 %v955
      %v957 = vand.u32 %v197, 4294901760
      %v958 = vsub.f32 %v197, %v957
      %v959 = vand.u32 %v958, 4294901760
      %960 = vmatpush.msra.mxu0 %v959
      %v961 = vand.u32 %v176, 4294901760
      %962 = vmatmul.f32.gmra.mxu0 %v961
      %v963 = vpop.f32.mrf.mxu0
      %v964 = vadd.f32 %v883, %v963
      %v965 = vand.u32 %v178, 4294901760
      %966 = vmatmul.f32.gmra.mxu0 %v965
      %v967 = vpop.f32.mrf.mxu0
      %v968 = vadd.f32 %v889, %v967
      %v969 = vand.u32 %v180, 4294901760
      %970 = vmatmul.f32.gmra.mxu0 %v969
      %v971 = vpop.f32.mrf.mxu0
      %v972 = vadd.f32 %v895, %v971
      %973 = vdwg.mxu0
      %v974 = vand.u32 %v212, 4294901760
      %975 = vmatpush.msra.mxu0 %v974
      %v976 = vand.u32 %v211, 4294901760
      %977 = vmatpush.msra.mxu0 %v976
      %v978 = vand.u32 %v210, 4294901760
      %979 = vmatpush.msra.mxu0 %v978
      %v980 = vand.u32 %v209, 4294901760
      %981 = vmatpush.msra.mxu0 %v980
      %v982 = vand.u32 %v208, 4294901760
      %983 = vmatpush.msra.mxu0 %v982
      %v984 = vand.u32 %v207, 4294901760
      %985 = vmatpush.msra.mxu0 %v984
      %v986 = vand.u32 %v206, 4294901760
      %987 = vmatpush.msra.mxu0 %v986
      %v988 = vand.u32 %v205, 4294901760
      %989 = vmatpush.msra.mxu0 %v988
      %v990 = vand.u32 %v204, 4294901760
      %991 = vmatpush.msra.mxu0 %v990
      %v992 = vand.u32 %v203, 4294901760
      %993 = vmatpush.msra.mxu0 %v992
      %v994 = vand.u32 %v202, 4294901760
      %995 = vmatpush.msra.mxu0 %v994
      %v996 = vand.u32 %v201, 4294901760
      %997 = vmatpush.msra.mxu0 %v996
      %v998 = vand.u32 %v200, 4294901760
      %999 = vmatpush.msra.mxu0 %v998
      %v1000 = vand.u32 %v199, 4294901760
      %1001 = vmatpush.msra.mxu0 %v1000
      %v1002 = vand.u32 %v198, 4294901760
      %1003 = vmatpush.msra.mxu0 %v1002
      %v1004 = vand.u32 %v197, 4294901760
      %1005 = vmatpush.msra.mxu0 %v1004
      %v1006 = vand.u32 %v176, 4294901760
      %1007 = vmatmul.f32.gmra.mxu0 %v1006
      %v1008 = vpop.f32.mrf.mxu0
      %v1009 = vadd.f32 %v964, %v1008
      %v1010 = vand.u32 %v178, 4294901760
      %1011 = vmatmul.f32.gmra.mxu0 %v1010
      %v1012 = vpop.f32.mrf.mxu0
      %v1013 = vadd.f32 %v968, %v1012
      %v1014 = vand.u32 %v180, 4294901760
      %1015 = vmatmul.f32.gmra.mxu0 %v1014
      %v1016 = vpop.f32.mrf.mxu0
      %v1017 = vadd.f32 %v972, %v1016
      %1018 = vdwg.mxu0
      %1019 = vst [vmem:[%s174] sm:$0xff] %v1009
      %1020 = vst [vmem:[%s174 + $0x8] sm:$0xff] %v1013
      %1021 = vst [vmem:[%s174 + $0x10] sm:$0x1f] %v1017
      %p1022 = scmp.lt.s32.totalorder %s17, 1
      %s1023 = scalar_select %p1022, %s17, 1
      %p1024 = scmp.lt.s32.totalorder %s18, 0
      %s1025 = scalar_select %p1024, %s18, 0
      %s1026 = smul.addr %s1023, 3
      %s1027 = sadd.s32 %s1025, %s1026
      %s1028 = smul.addr %s1027, 8
      %s1029 = scalar_lea.vmem %s2, %s1028
      // Predicated region
      $region29: #{spp_layer.1} parent=27 // pred_check
        %p1030 = pneg %p94
      $region30: #{spp_layer.1} parent=27 // pred_check_branch
        %1032 = sbr.rel (%p1030) target = $region32
      $region31: #{spp_layer.1} parent=27 // pred_region
        _
      $region32: #{spp_layer.1} parent=27 // pred_fallthru
        _
    $region28: #{spp_layer.1} parent=5 // pred_fallthru
      _
    %p1033 = scmp.le.s32.totalorder 2, %s8
    // Predicated region
    $region33: #{spp_layer.1} parent=5 // pred_check
      %p1034 = pneg %p1033
    $region34: #{spp_layer.1} parent=5 // pred_check_branch
      %1036 = sbr.rel (%p1034) target = $region36
    $region35: #{spp_layer.1} parent=5 // pred_region
      %s1037 = ssub.s32 %s8, 2
      // Predicated region
      $region37: #{spp_layer.1} parent=35 // pred_check
        %p1038 = pneg %p100
      $region38: #{spp_layer.1} parent=35 // pred_check_branch
        %1040 = sbr.rel (%p1038) target = $region40
      $region39: #{spp_layer.1} parent=35 // pred_region
        %p1041 = scmp.lt.s32.totalorder %s19, 1
        %s1042 = scalar_select %p1041, %s19, 1
        %p1043 = scmp.lt.s32.totalorder %s20, 0
        %s1044 = scalar_select %p1043, %s20, 0
        %s1045 = smul.addr %s1042, 3
        %s1046 = sadd.s32 %s1044, %s1045
        %s1047 = smul.addr %s1046, 8
        %s1048 = scalar_lea.vmem %s2, %s1047
      $region40: #{spp_layer.1} parent=35 // pred_fallthru
        _
    $region36: #{spp_layer.1} parent=5 // pred_fallthru
      _
  $region6: #{spp_layer.1} parent=0 // loop_footer
    %s12 = sadd.s32 1, %s8
  $region7: #{spp_layer.1} parent=0 // loop_footer_branch
    %7 = sbr.rel target = $region3
  $region8: #{spp_layer.1} parent=0 // loop_exit
    _

</llo_original>
